<compile_context>
chip_gen: v7x
topology: tpu7x:2x2x1
jax: 0.10.0
libtpu: 0.0.40
codegen_flags: <defaults>
</compile_context>

<pallas_src>
import functools

import jax
import jax.numpy as jnp
from jax import lax
from jax.experimental import pallas as pl
from jax.experimental.pallas import tpu as pltpu

LANES = 128
SUBLANES = 8
GROUP = SUBLANES * LANES              # 1024 elements per (8,128) vreg group
TILE_BYTES_CAP = 4 * 1024 * 1024      # ~4 MiB per input tile (per review)
VMEM_LIMIT_BYTES = 40 * 1024 * 1024   # 2 in x 2 bufs x 4 MiB = 16 MiB + headroom


def _round_up(a: int, b: int) -> int:
    return ((a + b - 1) // b) * b


def _pick_unroll(n_groups: int) -> int:
    for u in (8, 4, 2):
        if n_groups % u == 0:
            return u
    return 1


def _pearson_partial_kernel(c_ref, x_ref, y_ref, o_ref, *, groups_full, groups_last):
    """Accumulate centered partial moments into the resident (40,128) block.

    o_ref holds five stacked (8,128) f32 accumulators [Sx, Sy, Sxx, Syy, Sxy]
    of (x - cx), (y - cy); it stays resident across the (single, "arbitrary")
    grid axis and is written back to HBM once at the end.
    """
    t = pl.program_id(0)

    # Pilot means from SMEM, hoisted to (8,128) vregs once per grid step.
    cx = jnp.full((SUBLANES, LANES), c_ref[0], dtype=jnp.float32)
    cy = jnp.full((SUBLANES, LANES), c_ref[1], dtype=jnp.float32)

    @pl.when(t == 0)
    def _init():
        o_ref[...] = jnp.zeros_like(o_ref)

    def accumulate(n_groups):
        u = _pick_unroll(n_groups)

        def body(i, carry):
            sx, sy, sxx, syy, sxy = carry
            for j in range(u):                     # manual unroll (static)
                r0 = pl.multiple_of((i * u + j) * SUBLANES, SUBLANES)
                xg = x_ref[pl.ds(r0, SUBLANES), :].astype(jnp.float32) - cx
                yg = y_ref[pl.ds(r0, SUBLANES), :].astype(jnp.float32) - cy
                sx = sx + xg
                sy = sy + yg
                sxx = sxx + xg * xg
                syy = syy + yg * yg
                sxy = sxy + xg * yg
            return (sx, sy, sxx, syy, sxy)

        z = jnp.zeros((SUBLANES, LANES), jnp.float32)
        sx, sy, sxx, syy, sxy = lax.fori_loop(0, n_groups // u, body, (z, z, z, z, z))

        o_ref[0:8, :] += sx
        o_ref[8:16, :] += sy
        o_ref[16:24, :] += sxx
        o_ref[24:32, :] += syy
        o_ref[32:40, :] += sxy

    if groups_last == groups_full:
        accumulate(groups_full)
    else:
        nt = pl.num_programs(0)

        @pl.when(t != nt - 1)
        def _full_tile():
            accumulate(groups_full)

        @pl.when(t == nt - 1)
        def _short_tile():
            accumulate(groups_last)


@jax.jit
def pearson_loss(inputs, targets):
    """loss = 1 - pearson_corrcoef(flatten(inputs), flatten(targets))."""
    x = jnp.ravel(inputs)
    y = jnp.ravel(targets)
    n_total = x.shape[0]

    # Cheap pilot means (tiny prefix) so the kernel accumulates *centered*
    # moments -> avoids catastrophic cancellation of raw f32 moments.
    k_pilot = min(n_total, 4096)
    cx = jnp.mean(x[:k_pilot].astype(jnp.float32))
    cy = jnp.mean(y[:k_pilot].astype(jnp.float32))
    c = jnp.stack([cx, cy]).astype(jnp.float32)

    # Reshape to lane-dense (rows, 128) with rows % 8 == 0.  Padding (a full
    # HBM copy) only happens when n is not already a multiple of 1024; the
    # padded zeros' contribution is removed analytically after the kernel.
    padded_n = _round_up(n_total, GROUP)
    pad = padded_n - n_total
    if pad:
        # TODO(synk): for non-1024-multiple sizes this still copies x/y once;
        # a manual-DMA (memory_space=pl.ANY) tail path would remove that copy.
        x = jnp.pad(x, (0, pad))
        y = jnp.pad(y, (0, pad))
    rows = padded_n // LANES
    x2d = x.reshape(rows, LANES)
    y2d = y.reshape(rows, LANES)

    # Tile sizing: ~4 MiB per input tile regardless of dtype.
    itemsize = max(x2d.dtype.itemsize, y2d.dtype.itemsize)
    cap_rows = max(SUBLANES,
                   (TILE_BYTES_CAP // (LANES * itemsize)) // SUBLANES * SUBLANES)
    tile_rows = min(cap_rows, rows)
    n_tiles = -(-rows // tile_rows)
    rows_last = rows - (n_tiles - 1) * tile_rows     # multiple of 8, >= 8

    kernel = functools.partial(
        _pearson_partial_kernel,
        groups_full=tile_rows // SUBLANES,
        groups_last=rows_last // SUBLANES,
    )

    bytes_accessed = int(x2d.size * x2d.dtype.itemsize
                         + y2d.size * y2d.dtype.itemsize
                         + 5 * SUBLANES * LANES * 4)

    partial = pl.pallas_call(
        kernel,
        out_shape=jax.ShapeDtypeStruct((5 * SUBLANES, LANES), jnp.float32),
        grid_spec=pltpu.PrefetchScalarGridSpec(
            num_scalar_prefetch=0,
            grid=(n_tiles,),
            in_specs=[
                pl.BlockSpec(memory_space=pltpu.MemorySpace.SMEM),   # pilot means
                pl.BlockSpec((tile_rows, LANES), lambda t: (t, 0)),  # x tiles
                pl.BlockSpec((tile_rows, LANES), lambda t: (t, 0)),  # y tiles
            ],
            out_specs=pl.BlockSpec((5 * SUBLANES, LANES), lambda t: (0, 0)),
        ),
        compiler_params=pltpu.CompilerParams(
            dimension_semantics=("arbitrary",),      # reduction axis (resident acc)
            vmem_limit_bytes=VMEM_LIMIT_BYTES,
        ),
        cost_estimate=pl.CostEstimate(
            flops=int(10 * padded_n),
            transcendentals=0,
            bytes_accessed=bytes_accessed,
        ),
    )(c, x2d, y2d)

    # Tiny final combine in plain JAX.
    stats = partial.reshape(5, SUBLANES * LANES)
    s = jnp.sum(stats, axis=1)
    sx, sy, sxx, syy, sxy = s[0], s[1], s[2], s[3], s[4]

    if pad:
        # Remove contribution of `pad` zero elements shifted to (-cx, -cy).
        padf = jnp.float32(pad)
        sx = sx + padf * cx
        sy = sy + padf * cy
        sxx = sxx - padf * cx * cx
        syy = syy - padf * cy * cy
        sxy = sxy - padf * cx * cy

    n = jnp.float32(n_total)
    cov = sxy - sx * sy / n
    var_x = jnp.maximum(sxx - sx * sx / n, 0.0)   # clamp fp-rounding negatives
    var_y = jnp.maximum(syy - sy * sy / n, 0.0)
    # NOTE: constant inputs give var == 0 -> inf/nan, same as the reference.
    r = cov / (jnp.sqrt(var_x) * jnp.sqrt(var_y))
    return 1.0 - r


def _pearson_loss_ref(inputs, targets):
    x = jnp.ravel(inputs).astype(jnp.float32)
    y = jnp.ravel(targets).astype(jnp.float32)
    vx = x - jnp.mean(x)
    vy = y - jnp.mean(y)
    r = jnp.sum(vx * vy) / (jnp.sqrt(jnp.sum(vx * vx)) * jnp.sqrt(jnp.sum(vy * vy)))
    return 1.0 - r


if __name__ == "__main__":
    key = jax.random.PRNGKey(0)
    k1, k2, k3, k4 = jax.random.split(key, 4)

    # Primary small NCHW-style example: batch=2, channels=4, spatial=16x16.
    x = jax.random.normal(k1, (2, 4, 16, 16), dtype=jnp.float32)
    y = 0.7 * x + 0.3 * jax.random.normal(k2, (2, 4, 16, 16), dtype=jnp.float32)
    loss = jax.block_until_ready(pearson_loss(x, y))
    ref = _pearson_loss_ref(x, y)
    assert jnp.allclose(loss, ref, atol=1e-5, rtol=1e-5), (loss, ref)

    # Ragged size (not a multiple of 8*128) with a nonzero mean:
    # exercises the pad-correction path and the pilot centering.
    xr_ = jax.random.normal(k3, (3, 5, 7, 11), dtype=jnp.float32) + 2.5
    yr_ = 0.5 * xr_ + 0.4 * jax.random.normal(k4, (3, 5, 7, 11), dtype=jnp.float32)
    loss_r = jax.block_until_ready(pearson_loss(xr_, yr_))
    ref_r = _pearson_loss_ref(xr_, yr_)
    assert jnp.allclose(loss_r, ref_r, atol=1e-4, rtol=1e-4), (loss_r, ref_r)

    # Multi-tile case with a shorter last tile: exercises the two-branch kernel.
    n_big = (8192 + 512) * 128
    xb = jax.random.normal(k3, (n_big,), dtype=jnp.float32)
    yb = 0.6 * xb + 0.8 * jax.random.normal(k4, (n_big,), dtype=jnp.float32)
    loss_b = jax.block_until_ready(pearson_loss(xb, yb))
    ref_b = _pearson_loss_ref(xb, yb)
    assert jnp.allclose(loss_b, ref_b, atol=1e-4, rtol=1e-4), (loss_b, ref_b)

    print("KERNEL_OK")
</pallas_src>

<mosaic_0001>
module attributes {stable_mosaic.version = 11 : i64} {
  func.func @_pearson_partial_kernel(%arg0: i32, %arg1: memref<2xf32, #tpu.memory_space<smem>>, %arg2: memref<16x128xf32, #tpu.memory_space<vmem>>, %arg3: memref<16x128xf32, #tpu.memory_space<vmem>>, %arg4: memref<40x128xf32, #tpu.memory_space<vmem>>) attributes {dimension_semantics = [#tpu.dimension_semantics<arbitrary>], iteration_bounds = array<i64: 1>, scalar_prefetch = 0 : i64, scratch_operands = 0 : i64, tpu.core_type = #tpu.core_type<tc>, window_params = [{transform_indices = @transform_0, window_bounds = array<i64: 2>}, {transform_indices = @transform_1, window_bounds = array<i64: 16, 128>}, {transform_indices = @transform_2, window_bounds = array<i64: 16, 128>}, {pipeline_mode = #tpu.pipeline_mode<synchronous>, transform_indices = @transform_3, window_bounds = array<i64: 40, 128>}]} {
    %c0 = arith.constant 0 : index
    %0 = memref.load %arg1[%c0] : memref<2xf32, #tpu.memory_space<smem>>
    %1 = vector.broadcast %0 : f32 to vector<8x128xf32>
    %c1 = arith.constant 1 : index
    %2 = memref.load %arg1[%c1] : memref<2xf32, #tpu.memory_space<smem>>
    %3 = vector.broadcast %2 : f32 to vector<8x128xf32>
    %c0_i32 = arith.constant 0 : i32
    %4 = arith.cmpi eq, %arg0, %c0_i32 : i32
    %5 = arith.extui %4 : i1 to i32
    %c0_i32_0 = arith.constant 0 : i32
    %6 = arith.cmpi ne, %5, %c0_i32_0 : i32
    scf.if %6 {
      %cst_26 = arith.constant 0.000000e+00 : f32
      %59 = vector.broadcast %cst_26 : f32 to vector<40x128xf32>
      %c0_27 = arith.constant 0 : index
      %c0_28 = arith.constant 0 : index
      %60 = vector.load %arg4[%c0_27, %c0_28] : memref<40x128xf32, #tpu.memory_space<vmem>>, vector<40x128xf32>
      tpu.vector_store %arg4[%c0_27, %c0_28], %59 {strides = array<i32>} : memref<40x128xf32, #tpu.memory_space<vmem>>, vector<40x128xf32>,
    } else {
    }
    %cst = arith.constant 0.000000e+00 : f32
    %7 = vector.broadcast %cst : f32 to vector<8x128xf32>
    %c0_i32_1 = arith.constant 0 : i32
    %c2_i32 = arith.constant 2 : i32
    %8 = arith.muli %c0_i32_1, %c2_i32 : i32
    %c0_i32_2 = arith.constant 0 : i32
    %9 = arith.addi %8, %c0_i32_2 : i32
    %c8_i32 = arith.constant 8 : i32
    %10 = arith.muli %9, %c8_i32 : i32
    %11 = tpu.assume_multiple %10, 8 : i32
    %12 = arith.index_cast %11 : i32 to index
    %c0_3 = arith.constant 0 : index
    %13 = vector.load %arg2[%12, %c0_3] : memref<16x128xf32, #tpu.memory_space<vmem>>, vector<8x128xf32>
    %14 = arith.subf %13, %1 : vector<8x128xf32>
    %15 = arith.index_cast %11 : i32 to index
    %c0_4 = arith.constant 0 : index
    %16 = vector.load %arg3[%15, %c0_4] : memref<16x128xf32, #tpu.memory_space<vmem>>, vector<8x128xf32>
    %17 = arith.subf %16, %3 : vector<8x128xf32>
    %18 = arith.addf %7, %14 : vector<8x128xf32>
    %19 = arith.addf %7, %17 : vector<8x128xf32>
    %20 = arith.mulf %14, %14 : vector<8x128xf32>
    %21 = arith.addf %7, %20 : vector<8x128xf32>
    %22 = arith.mulf %17, %17 : vector<8x128xf32>
    %23 = arith.addf %7, %22 : vector<8x128xf32>
    %24 = arith.mulf %14, %17 : vector<8x128xf32>
    %25 = arith.addf %7, %24 : vector<8x128xf32>
    %c2_i32_5 = arith.constant 2 : i32
    %26 = arith.muli %c0_i32_1, %c2_i32_5 : i32
    %c1_i32 = arith.constant 1 : i32
    %27 = arith.addi %26, %c1_i32 : i32
    %c8_i32_6 = arith.constant 8 : i32
    %28 = arith.muli %27, %c8_i32_6 : i32
    %29 = tpu.assume_multiple %28, 8 : i32
    %30 = arith.index_cast %29 : i32 to index
    %c0_7 = arith.constant 0 : index
    %31 = vector.load %arg2[%30, %c0_7] : memref<16x128xf32, #tpu.memory_space<vmem>>, vector<8x128xf32>
    %32 = arith.subf %31, %1 : vector<8x128xf32>
    %33 = arith.index_cast %29 : i32 to index
    %c0_8 = arith.constant 0 : index
    %34 = vector.load %arg3[%33, %c0_8] : memref<16x128xf32, #tpu.memory_space<vmem>>, vector<8x128xf32>
    %35 = arith.subf %34, %3 : vector<8x128xf32>
    %36 = arith.addf %18, %32 : vector<8x128xf32>
    %37 = arith.addf %19, %35 : vector<8x128xf32>
    %38 = arith.mulf %32, %32 : vector<8x128xf32>
    %39 = arith.addf %21, %38 : vector<8x128xf32>
    %40 = arith.mulf %35, %35 : vector<8x128xf32>
    %41 = arith.addf %23, %40 : vector<8x128xf32>
    %42 = arith.mulf %32, %35 : vector<8x128xf32>
    %43 = arith.addf %25, %42 : vector<8x128xf32>
    %c1_i32_9 = arith.constant 1 : i32
    %c0_10 = arith.constant 0 : index
    %c0_11 = arith.constant 0 : index
    %44 = vector.load %arg4[%c0_10, %c0_11] : memref<40x128xf32, #tpu.memory_space<vmem>>, vector<8x128xf32>
    %45 = arith.addf %44, %36 : vector<8x128xf32>
    %c0_12 = arith.constant 0 : index
    %c0_13 = arith.constant 0 : index
    %46 = vector.load %arg4[%c0_12, %c0_13] : memref<40x128xf32, #tpu.memory_space<vmem>>, vector<8x128xf32>
    tpu.vector_store %arg4[%c0_12, %c0_13], %45 {strides = array<i32>} : memref<40x128xf32, #tpu.memory_space<vmem>>, vector<8x128xf32>,
    %c8 = arith.constant 8 : index
    %c0_14 = arith.constant 0 : index
    %47 = vector.load %arg4[%c8, %c0_14] : memref<40x128xf32, #tpu.memory_space<vmem>>, vector<8x128xf32>
    %48 = arith.addf %47, %37 : vector<8x128xf32>
    %c8_15 = arith.constant 8 : index
    %c0_16 = arith.constant 0 : index
    %49 = vector.load %arg4[%c8_15, %c0_16] : memref<40x128xf32, #tpu.memory_space<vmem>>, vector<8x128xf32>
    tpu.vector_store %arg4[%c8_15, %c0_16], %48 {strides = array<i32>} : memref<40x128xf32, #tpu.memory_space<vmem>>, vector<8x128xf32>,
    %c16 = arith.constant 16 : index
    %c0_17 = arith.constant 0 : index
    %50 = vector.load %arg4[%c16, %c0_17] : memref<40x128xf32, #tpu.memory_space<vmem>>, vector<8x128xf32>
    %51 = arith.addf %50, %39 : vector<8x128xf32>
    %c16_18 = arith.constant 16 : index
    %c0_19 = arith.constant 0 : index
    %52 = vector.load %arg4[%c16_18, %c0_19] : memref<40x128xf32, #tpu.memory_space<vmem>>, vector<8x128xf32>
    tpu.vector_store %arg4[%c16_18, %c0_19], %51 {strides = array<i32>} : memref<40x128xf32, #tpu.memory_space<vmem>>, vector<8x128xf32>,
    %c24 = arith.constant 24 : index
    %c0_20 = arith.constant 0 : index
    %53 = vector.load %arg4[%c24, %c0_20] : memref<40x128xf32, #tpu.memory_space<vmem>>, vector<8x128xf32>
    %54 = arith.addf %53, %41 : vector<8x128xf32>
    %c24_21 = arith.constant 24 : index
    %c0_22 = arith.constant 0 : index
    %55 = vector.load %arg4[%c24_21, %c0_22] : memref<40x128xf32, #tpu.memory_space<vmem>>, vector<8x128xf32>
    tpu.vector_store %arg4[%c24_21, %c0_22], %54 {strides = array<i32>} : memref<40x128xf32, #tpu.memory_space<vmem>>, vector<8x128xf32>,
    %c32 = arith.constant 32 : index
    %c0_23 = arith.constant 0 : index
    %56 = vector.load %arg4[%c32, %c0_23] : memref<40x128xf32, #tpu.memory_space<vmem>>, vector<8x128xf32>
    %57 = arith.addf %56, %43 : vector<8x128xf32>
    %c32_24 = arith.constant 32 : index
    %c0_25 = arith.constant 0 : index
    %58 = vector.load %arg4[%c32_24, %c0_25] : memref<40x128xf32, #tpu.memory_space<vmem>>, vector<8x128xf32>
    tpu.vector_store %arg4[%c32_24, %c0_25], %57 {strides = array<i32>} : memref<40x128xf32, #tpu.memory_space<vmem>>, vector<8x128xf32>,
    return
  }
  func.func @transform_0(%arg0: i32) -> i32 {
    %c0_i32 = arith.constant 0 : i32
    %c0_i32_0 = arith.constant 0 : i32
    return %c0_i32 : i32
  }
  func.func @transform_1(%arg0: i32) -> (i32, i32) {
    %c0_i32 = arith.constant 0 : i32
    %c0_i32_0 = arith.constant 0 : i32
    return %arg0, %c0_i32 : i32, i32
  }
  func.func @transform_2(%arg0: i32) -> (i32, i32) {
    %c0_i32 = arith.constant 0 : i32
    %c0_i32_0 = arith.constant 0 : i32
    return %arg0, %c0_i32 : i32, i32
  }
  func.func @transform_3(%arg0: i32) -> (i32, i32) {
    %c0_i32 = arith.constant 0 : i32
    %c0_i32_0 = arith.constant 0 : i32
    %c0_i32_1 = arith.constant 0 : i32
    return %c0_i32, %c0_i32_0 : i32, i32
  }
}

</mosaic_0001>

<llo_original>
// kernel: pearson_loss.1
$region0: #{pearson_loss.1}
  #allocation0 [shape = 'u32[]', space=smem, size = 0x4, offset = 0x4, fixed_abs, tag = 'smem constant byte address 0x4 - core index']
  #allocation1 [shape = 'u32[144,128]{1,0:T(1,128)}', space=vmem, size = 0x12000, scoped, tag = 'internal scratch']
  %s0 = inlined_call_operand.vmem [shape: f32[2], index: 0, kind: input, shape index: {}]
  %s1 = inlined_call_operand.vmem [shape: f32[16,128], index: 1, kind: input, shape index: {}]
  %s2 = inlined_call_operand.vmem [shape: f32[16,128], index: 2, kind: input, shape index: {}]
  %s3 = inlined_call_operand.vmem [shape: f32[40,128], index: 3, kind: output, shape index: {}]
  %s4 = sld [smem:[#allocation0]]
  $region30: #{pearson_loss.1} parent=0
    _
  %s6 = ssub.s32 1, %s4
  %s7 = scalar_select 0, %s6, %s4
  $region1: #{pearson_loss.1} parent=0
    #allocation2 [shape = 'u8[512]{0}', space=smem, size = 0x200, scoped, tag = 'input window, operand 0, single buffered']
    #allocation3 [shape = 's32[1]{0}', space=sflag, size = 0x4, scoped, tag = 'scoped memory for pearson_loss.1']
    %8 = vsyncpa [#allocation3], 0
    // Predicated region
    $region2: #{pearson_loss.1} parent=1 // pred_check
      _
    $region3: #{pearson_loss.1} parent=1 // pred_check_branch
      %10 = sbr.rel (0) target = $region5
    $region4: #{pearson_loss.1} parent=1 // pred_region
      %s12 = ssub.s32 16, 16
      %13 = vsyncadd [#allocation3], %s12
      %s15 = sshll.u32 %s0, 4
      %s16 = int_to_ptr.vmem [resolvable:$true] %s15
      %18 = dma.vmem_to_smem %s16, 16, [#allocation2], [#allocation3]
    $region5: #{pearson_loss.1} parent=1 // pred_fallthru
      _
    // Predicated region
    $region6: #{pearson_loss.1} parent=1 // pred_check
      _
    $region7: #{pearson_loss.1} parent=1 // pred_check_branch
      %20 = sbr.rel (0) target = $region9
    $region8: #{pearson_loss.1} parent=1 // pred_region
      _
    $region9: #{pearson_loss.1} parent=1 // pred_fallthru
      _
    // Predicated region
    $region10: #{pearson_loss.1} parent=1 // pred_check
      _
    $region11: #{pearson_loss.1} parent=1 // pred_check_branch
      %22 = sbr.rel (0) target = $region13
    $region12: #{pearson_loss.1} parent=1 // pred_region
      _
    $region13: #{pearson_loss.1} parent=1 // pred_fallthru
      _
    // Predicated region
    $region14: #{pearson_loss.1} parent=1 // pred_check
      _
    $region15: #{pearson_loss.1} parent=1 // pred_check_branch
      %24 = sbr.rel (0) target = $region17
    $region16: #{pearson_loss.1} parent=1 // pred_region
      %25 = dma.done [#allocation3], 16
    $region17: #{pearson_loss.1} parent=1 // pred_fallthru
      _
    %26 = sfence
    %s27 = sld [smem:[#allocation2]]
    %v28 = vstv %s27
    %s29 = sld [smem:[#allocation2 + $0x1]]
    %v30 = vstv %s29
    %p31 = scmp.eq.s32.totalorder 0, 0
    // Predicated region
    $region18: #{pearson_loss.1} parent=1 // pred_check
      %p32 = pneg %p31
    $region19: #{pearson_loss.1} parent=1 // pred_check_branch
      %34 = sbr.rel (%p32) target = $region21
    $region20: #{pearson_loss.1} parent=1 // pred_region
      %35 = vst [vmem:[%s3] sm:$0xff] 0.0
      %36 = vst [vmem:[%s3 + $0x8] sm:$0xff] 0.0
      %37 = vst [vmem:[%s3 + $0x10] sm:$0xff] 0.0
      %38 = vst [vmem:[%s3 + $0x18] sm:$0xff] 0.0
      %39 = vst [vmem:[%s3 + $0x20] sm:$0xff] 0.0
    $region21: #{pearson_loss.1} parent=1 // pred_fallthru
      _
    %v40 = vld [vmem:[%s1] sm:$0xff]
    %v41 = vsub.f32 %v40, %v28
    %v42 = vld [vmem:[%s2] sm:$0xff]
    %v43 = vsub.f32 %v42, %v30
    %v44 = vadd.f32 %v41, 0.0
    %v45 = vadd.f32 %v43, 0.0
    %v46 = vmul.f32 %v41, %v41
    %v47 = vadd.f32 %v46, 0.0
    %v48 = vmul.f32 %v43, %v43
    %v49 = vadd.f32 %v48, 0.0
    %v50 = vmul.f32 %v41, %v43
    %v51 = vadd.f32 %v50, 0.0
    %s52 = scalar_lea.vmem %s1, 8
    %v53 = vld [vmem:[%s52] sm:$0xff]
    %v54 = vsub.f32 %v53, %v28
    %s55 = scalar_lea.vmem %s2, 8
    %v56 = vld [vmem:[%s55] sm:$0xff]
    %v57 = vsub.f32 %v56, %v30
    %v58 = vadd.f32 %v44, %v54
    %v59 = vadd.f32 %v45, %v57
    %v60 = vmul.f32 %v54, %v54
    %v61 = vadd.f32 %v47, %v60
    %v62 = vmul.f32 %v57, %v57
    %v63 = vadd.f32 %v49, %v62
    %v64 = vmul.f32 %v54, %v57
    %v65 = vadd.f32 %v51, %v64
    %v66 = vld [vmem:[%s3] sm:$0xff]
    %v67 = vadd.f32 %v66, %v58
    %68 = vst [vmem:[%s3] sm:$0xff] %v67
    %v69 = vld [vmem:[%s3 + $0x8] sm:$0xff]
    %v70 = vadd.f32 %v69, %v59
    %71 = vst [vmem:[%s3 + $0x8] sm:$0xff] %v70
    %v72 = vld [vmem:[%s3 + $0x10] sm:$0xff]
    %v73 = vadd.f32 %v72, %v61
    %74 = vst [vmem:[%s3 + $0x10] sm:$0xff] %v73
    %v75 = vld [vmem:[%s3 + $0x18] sm:$0xff]
    %v76 = vadd.f32 %v75, %v63
    %77 = vst [vmem:[%s3 + $0x18] sm:$0xff] %v76
    %v78 = vld [vmem:[%s3 + $0x20] sm:$0xff]
    %v79 = vadd.f32 %v78, %v65
    %80 = vst [vmem:[%s3 + $0x20] sm:$0xff] %v79
    // Predicated region
    $region22: #{pearson_loss.1} parent=1 // pred_check
      _
    $region23: #{pearson_loss.1} parent=1 // pred_check_branch
      %82 = sbr.rel (0) target = $region25
    $region24: #{pearson_loss.1} parent=1 // pred_region
      _
    $region25: #{pearson_loss.1} parent=1 // pred_fallthru
      _
    // Predicated region
    $region26: #{pearson_loss.1} parent=1 // pred_check
      _
    $region27: #{pearson_loss.1} parent=1 // pred_check_branch
      %84 = sbr.rel (0) target = $region29
    $region28: #{pearson_loss.1} parent=1 // pred_region
      _
    $region29: #{pearson_loss.1} parent=1 // pred_fallthru
      _
    %85 = vsyncpa [#allocation3], 1

</llo_original>
